<compile_context>
chip_gen: v7x
topology: tpu7x:2x2x1
jax: 0.10.0
libtpu: 0.0.40
codegen_flags: <defaults>
</compile_context>

<pallas_src>
import jax
import jax.numpy as jnp
import numpy as np
from jax.experimental import pallas as pl
from jax.experimental.pallas import tpu as pltpu


def _round_up(x, m):
    return ((x + m - 1) // m) * m


def _largest_divisor_leq(n, cap):
    cap = max(1, min(cap, n))
    for b in range(cap, 0, -1):
        if n % b == 0:
            return b
    return 1


# ---------------------------------------------------------------------------
# Readout kernel.  grid = (N // BN, T // BT); no reduction grid axis.
#   x_ref    : (BN, C, BT, WH)   input block (native dtype)
#   w_ref    : (C, WH, Dp)       fused mask*feature*scale weight, VMEM-resident
#   bias_ref : (1, Dp)           f32
#   out_ref  : (BN, BT, Dp)
# ---------------------------------------------------------------------------
def _readout_kernel(x_ref, w_ref, bias_ref, out_ref):
    BN, C, BT, WH = x_ref.shape
    Dp = out_ref.shape[-1]

    acc = jnp.zeros((BN * BT, Dp), jnp.float32)
    # Statically unrolled channel reduction: C MXU dots with M = BN*BT rows,
    # f32 accumulation, weight already resident in VMEM.
    for c in range(C):
        xc = x_ref[:, c, :, :].reshape(BN * BT, WH)
        acc = acc + jnp.dot(xc, w_ref[c], preferred_element_type=jnp.float32)

    z = acc + bias_ref[...]                                   # (BN*BT, Dp) + (1, Dp)
    # softplus with PyTorch threshold=20 semantics (log1p for precision)
    sp = jnp.where(z > 20.0, z, jnp.log1p(jnp.exp(jnp.minimum(z, 20.0))))
    out_ref[...] = sp.reshape(BN, BT, Dp).astype(out_ref.dtype)


# ---------------------------------------------------------------------------
# Fused weights: gaussian masks x features x scale, emitted directly in the
# matmul-ready, lane-dense (C, W*H, D_pad) layout.  Few-KB of math -> plain JAX,
# computed entirely in f32 before any dtype cast.
# ---------------------------------------------------------------------------
def _fused_readout_weights(params, *, C, W, H, D, d_pad,
                           gaussian_mean_scale, gaussian_var_scale, positive):
    WH = W * H
    m = max(W, H)
    grid_w = jnp.linspace(-W / m, W / m, W, dtype=jnp.float32)
    grid_h = jnp.linspace(-H / m, H / m, H, dtype=jnp.float32)
    xx, yy = jnp.meshgrid(grid_w, grid_h, indexing="ij")             # (W, H)
    gx = xx.reshape(1, WH)
    gy = yy.reshape(1, WH)

    mean = params["mask_mean"].astype(jnp.float32) * gaussian_mean_scale      # (D, 2)
    logvar = params["mask_log_var"].reshape(D, 1).astype(jnp.float32) * gaussian_var_scale
    var = jnp.exp(jnp.clip(logvar, -20.0, 20.0))                     # (D, 1)

    dx = gx - mean[:, 0:1]                                           # (D, WH)
    dy = gy - mean[:, 1:2]
    pdf = (dx * dx + dy * dy) / (var + 1e-8)
    pdf = jnp.exp(-0.5 * jnp.minimum(pdf, 20.0))
    norm = jnp.sum(pdf, axis=1, keepdims=True)
    # clamp(pdf, max=20) bounds pdf below by exp(-10) so norm > 0; nan_to_num
    # matches the torch semantics as a safety net.
    masks = jnp.nan_to_num(pdf / norm)                               # (D, WH)

    feat = params["features"].reshape(C, D).astype(jnp.float32)
    if positive:
        feat = jnp.maximum(feat, 0.0)                                # clamp_(0)

    scale = params["scale_param"].reshape(1, D).astype(jnp.float32)
    feat = feat * scale                                              # fold scale into weight

    w = masks.T[None, :, :] * feat[:, None, :]                       # (C, WH, D)
    w_pad = jnp.zeros((C, WH, d_pad), jnp.float32).at[:, :, :D].set(w)
    return w_pad


# ---------------------------------------------------------------------------
# Public wrapper — identical semantics to SimpleSpatialXFeature3d.forward.
#   x: (N, C, T, W, H)  ->  (N, T, D)
# ---------------------------------------------------------------------------
def simple_spatial_x_feature3d_forward(x, params, *,
                                       gaussian_mean_scale=1.0,
                                       gaussian_var_scale=1.0,
                                       positive=False):
    N, C, T, W, H = x.shape
    D = params["mask_mean"].shape[0]
    WH = W * H
    d_pad = _round_up(D, 128)                    # lane-dense output slab

    # Tile sizes: big T tiles (>=512 rows when available), fold batch so that
    # the MXU M dimension BN*BT is large; both grid axes stay "parallel".
    BT = _largest_divisor_leq(T, 512)
    BN = _largest_divisor_leq(N, max(1, 512 // BT))
    grid = (N // BN, T // BT)

    w_fused = _fused_readout_weights(
        params, C=C, W=W, H=H, D=D, d_pad=d_pad,
        gaussian_mean_scale=gaussian_mean_scale,
        gaussian_var_scale=gaussian_var_scale,
        positive=positive).astype(x.dtype)

    bias = jnp.zeros((1, d_pad), jnp.float32).at[0, :D].set(
        params["bias_param"].reshape(D).astype(jnp.float32))

    # Native contiguous layout — free metadata reshape, no HBM transpose pass,
    # no dtype upcast of the dominant x stream.
    x_flat = x.reshape(N, C, T, WH)

    # VMEM budget (bytes): resident weight + double-buffered x/out tiles + bias,
    # with 1.5x headroom, clamped to [32 MiB, 64 MiB] so it is valid on v7x too.
    itemsize = x.dtype.itemsize
    vmem_needed = (2 * C * WH * d_pad * itemsize
                   + 2 * BN * C * BT * WH * itemsize
                   + 2 * BN * BT * d_pad * itemsize
                   + 2 * d_pad * 4)
    vmem_limit = int(min(64 << 20, max(32 << 20, int(vmem_needed * 1.5))))

    out_pad = pl.pallas_call(
        _readout_kernel,
        out_shape=jax.ShapeDtypeStruct((N, T, d_pad), x.dtype),
        grid=grid,
        in_specs=[
            pl.BlockSpec((BN, C, BT, WH), lambda i, j: (i, 0, j, 0)),
            pl.BlockSpec((C, WH, d_pad), lambda i, j: (0, 0, 0)),   # resident weight
            pl.BlockSpec((1, d_pad), lambda i, j: (0, 0)),
        ],
        out_specs=pl.BlockSpec((BN, BT, d_pad), lambda i, j: (i, j, 0)),
        compiler_params=pltpu.CompilerParams(
            dimension_semantics=("parallel", "parallel"),
            vmem_limit_bytes=vmem_limit),
    )(x_flat, w_fused, bias)

    return out_pad[:, :, :D]                                         # (N, T, D)


# ---------------------------------------------------------------------------
# Pure-JAX reference (mirrors the PyTorch forward exactly)
# ---------------------------------------------------------------------------
def reference_forward(x, params, gaussian_mean_scale=1.0, gaussian_var_scale=1.0,
                      positive=False):
    N, C, T, W, H = x.shape
    D = params["mask_mean"].shape[0]
    m = max(W, H)
    grid_w = jnp.linspace(-W / m, W / m, W, dtype=jnp.float32)
    grid_h = jnp.linspace(-H / m, H / m, H, dtype=jnp.float32)
    xx, yy = jnp.meshgrid(grid_w, grid_h, indexing="ij")
    grid = jnp.broadcast_to(jnp.stack([xx, yy], axis=2)[None], (D, W, H, 2))

    scaled_log_var = params["mask_log_var"] * gaussian_var_scale
    mask_var = jnp.exp(jnp.clip(scaled_log_var, -20.0, 20.0)).reshape(-1, 1, 1)
    pdf = grid - params["mask_mean"].reshape(D, 1, 1, 2) * gaussian_mean_scale
    pdf = jnp.sum(pdf ** 2, axis=-1) / (mask_var + 1e-8)
    pdf = jnp.exp(-0.5 * jnp.minimum(pdf, 20.0))
    norm = jnp.sum(pdf, axis=(1, 2), keepdims=True)
    pdf = jnp.nan_to_num(pdf / norm)                          # (D, W, H)
    masks = jnp.transpose(pdf, (1, 2, 0))                     # (W, H, D)

    feat = params["features"]
    if positive:
        feat = jnp.maximum(feat, 0.0)
    y = jnp.einsum("nctwh,whd->nctd", x, masks)
    y = (y * feat).sum(axis=1)                                # (N, T, D)
    z = y * params["scale_param"] + params["bias_param"]
    return jnp.where(z > 20.0, z, jnp.log1p(jnp.exp(jnp.minimum(z, 20.0))))


if __name__ == "__main__":
    # in_shape = (c, t, w, h) = (4, 8, 16, 16), outdims = 8, batch = 2
    N, C, T, W, H, D = 2, 4, 8, 16, 16, 8
    key = jax.random.PRNGKey(0)
    k1, k2, k3, k4, k5, k6 = jax.random.split(key, 6)

    x = jax.random.normal(k1, (N, C, T, W, H), dtype=jnp.float32)
    params = {
        "mask_mean": 0.1 * jax.random.normal(k2, (D, 2), dtype=jnp.float32),
        "mask_log_var": 0.1 * jax.random.normal(k3, (D,), dtype=jnp.float32),
        # features ~ N(1/c, 0.01), shape (1, c, 1, outdims)
        "features": 1.0 / C + 0.01 * jax.random.normal(k4, (1, C, 1, D), dtype=jnp.float32),
        # slight noise on scale/bias for a stronger test
        "scale_param": 1.0 + 0.01 * jax.random.normal(k5, (D,), dtype=jnp.float32),
        "bias_param": 0.1 * jax.random.normal(k6, (D,), dtype=jnp.float32),
    }

    out = simple_spatial_x_feature3d_forward(x, params)
    out = jax.block_until_ready(out)

    ref = reference_forward(x, params)
    np.testing.assert_allclose(np.asarray(out), np.asarray(ref), rtol=1e-4, atol=1e-5)
    print("KERNEL_OK")
</pallas_src>

<mosaic_0001>
module attributes {stable_mosaic.version = 11 : i64} {
  func.func @_readout_kernel(%arg0: i32, %arg1: i32, %arg2: memref<2x4x8x256xf32, #tpu.memory_space<vmem>>, %arg3: memref<4x256x128xf32, #tpu.memory_space<vmem>>, %arg4: memref<1x128xf32, #tpu.memory_space<vmem>>, %arg5: memref<2x8x128xf32, #tpu.memory_space<vmem>>) attributes {dimension_semantics = [#tpu.dimension_semantics<parallel>, #tpu.dimension_semantics<parallel>], iteration_bounds = array<i64: 1, 1>, scalar_prefetch = 0 : i64, scratch_operands = 0 : i64, tpu.core_type = #tpu.core_type<tc>, window_params = [{transform_indices = @transform_0, window_bounds = array<i64: 2, 4, 8, 256>}, {pipeline_mode = #tpu.pipeline_mode<synchronous>, transform_indices = @transform_1, window_bounds = array<i64: 4, 256, 128>}, {pipeline_mode = #tpu.pipeline_mode<synchronous>, transform_indices = @transform_2, window_bounds = array<i64: 1, 128>}, {transform_indices = @transform_3, window_bounds = array<i64: 2, 8, 128>}]} {
    %cst = arith.constant 0.000000e+00 : f32
    %0 = vector.broadcast %cst : f32 to vector<16x128xf32>
    %c0 = arith.constant 0 : index
    %c0_0 = arith.constant 0 : index
    %c0_1 = arith.constant 0 : index
    %c0_2 = arith.constant 0 : index
    %1 = vector.load %arg2[%c0, %c0_0, %c0_1, %c0_2] : memref<2x4x8x256xf32, #tpu.memory_space<vmem>>, vector<2x1x8x256xf32>
    %2 = vector.shape_cast %1 : vector<2x1x8x256xf32> to vector<2x8x256xf32>
    %3 = vector.shape_cast %2 : vector<2x8x256xf32> to vector<16x256xf32>
    %c0_3 = arith.constant 0 : index
    %c0_4 = arith.constant 0 : index
    %c0_5 = arith.constant 0 : index
    %4 = vector.load %arg3[%c0_3, %c0_4, %c0_5] : memref<4x256x128xf32, #tpu.memory_space<vmem>>, vector<1x256x128xf32>
    %5 = vector.shape_cast %4 : vector<1x256x128xf32> to vector<256x128xf32>
    %cst_6 = arith.constant dense<0.000000e+00> : vector<16x128xf32>
    %6 = tpu.matmul %3, %5, %cst_6 {dimension_numbers = #tpu.dot_dimension_numbers<[1], [0], [0], [1], [0, 0, 1, 1], [], []>} : vector<16x256xf32>, vector<256x128xf32>, vector<16x128xf32> -> vector<16x128xf32>
    %7 = arith.addf %0, %6 : vector<16x128xf32>
    %c0_7 = arith.constant 0 : index
    %c1 = arith.constant 1 : index
    %c0_8 = arith.constant 0 : index
    %c0_9 = arith.constant 0 : index
    %8 = vector.load %arg2[%c0_7, %c1, %c0_8, %c0_9] : memref<2x4x8x256xf32, #tpu.memory_space<vmem>>, vector<2x1x8x256xf32>
    %9 = vector.shape_cast %8 : vector<2x1x8x256xf32> to vector<2x8x256xf32>
    %10 = vector.shape_cast %9 : vector<2x8x256xf32> to vector<16x256xf32>
    %c1_10 = arith.constant 1 : index
    %c0_11 = arith.constant 0 : index
    %c0_12 = arith.constant 0 : index
    %11 = vector.load %arg3[%c1_10, %c0_11, %c0_12] : memref<4x256x128xf32, #tpu.memory_space<vmem>>, vector<1x256x128xf32>
    %12 = vector.shape_cast %11 : vector<1x256x128xf32> to vector<256x128xf32>
    %cst_13 = arith.constant dense<0.000000e+00> : vector<16x128xf32>
    %13 = tpu.matmul %10, %12, %cst_13 {dimension_numbers = #tpu.dot_dimension_numbers<[1], [0], [0], [1], [0, 0, 1, 1], [], []>} : vector<16x256xf32>, vector<256x128xf32>, vector<16x128xf32> -> vector<16x128xf32>
    %14 = arith.addf %7, %13 : vector<16x128xf32>
    %c0_14 = arith.constant 0 : index
    %c2 = arith.constant 2 : index
    %c0_15 = arith.constant 0 : index
    %c0_16 = arith.constant 0 : index
    %15 = vector.load %arg2[%c0_14, %c2, %c0_15, %c0_16] : memref<2x4x8x256xf32, #tpu.memory_space<vmem>>, vector<2x1x8x256xf32>
    %16 = vector.shape_cast %15 : vector<2x1x8x256xf32> to vector<2x8x256xf32>
    %17 = vector.shape_cast %16 : vector<2x8x256xf32> to vector<16x256xf32>
    %c2_17 = arith.constant 2 : index
    %c0_18 = arith.constant 0 : index
    %c0_19 = arith.constant 0 : index
    %18 = vector.load %arg3[%c2_17, %c0_18, %c0_19] : memref<4x256x128xf32, #tpu.memory_space<vmem>>, vector<1x256x128xf32>
    %19 = vector.shape_cast %18 : vector<1x256x128xf32> to vector<256x128xf32>
    %cst_20 = arith.constant dense<0.000000e+00> : vector<16x128xf32>
    %20 = tpu.matmul %17, %19, %cst_20 {dimension_numbers = #tpu.dot_dimension_numbers<[1], [0], [0], [1], [0, 0, 1, 1], [], []>} : vector<16x256xf32>, vector<256x128xf32>, vector<16x128xf32> -> vector<16x128xf32>
    %21 = arith.addf %14, %20 : vector<16x128xf32>
    %c0_21 = arith.constant 0 : index
    %c3 = arith.constant 3 : index
    %c0_22 = arith.constant 0 : index
    %c0_23 = arith.constant 0 : index
    %22 = vector.load %arg2[%c0_21, %c3, %c0_22, %c0_23] : memref<2x4x8x256xf32, #tpu.memory_space<vmem>>, vector<2x1x8x256xf32>
    %23 = vector.shape_cast %22 : vector<2x1x8x256xf32> to vector<2x8x256xf32>
    %24 = vector.shape_cast %23 : vector<2x8x256xf32> to vector<16x256xf32>
    %c3_24 = arith.constant 3 : index
    %c0_25 = arith.constant 0 : index
    %c0_26 = arith.constant 0 : index
    %25 = vector.load %arg3[%c3_24, %c0_25, %c0_26] : memref<4x256x128xf32, #tpu.memory_space<vmem>>, vector<1x256x128xf32>
    %26 = vector.shape_cast %25 : vector<1x256x128xf32> to vector<256x128xf32>
    %cst_27 = arith.constant dense<0.000000e+00> : vector<16x128xf32>
    %27 = tpu.matmul %24, %26, %cst_27 {dimension_numbers = #tpu.dot_dimension_numbers<[1], [0], [0], [1], [0, 0, 1, 1], [], []>} : vector<16x256xf32>, vector<256x128xf32>, vector<16x128xf32> -> vector<16x128xf32>
    %28 = arith.addf %21, %27 : vector<16x128xf32>
    %c0_28 = arith.constant 0 : index
    %c0_29 = arith.constant 0 : index
    %29 = vector.load %arg4[%c0_28, %c0_29] : memref<1x128xf32, #tpu.memory_space<vmem>>, vector<1x128xf32>
    %30 = vector.broadcast %29 : vector<1x128xf32> to vector<16x128xf32>
    %31 = arith.addf %28, %30 : vector<16x128xf32>
    %cst_30 = arith.constant 2.000000e+01 : f32
    %32 = vector.broadcast %cst_30 : f32 to vector<16x128xf32>
    %33 = arith.cmpf ogt, %31, %32 : vector<16x128xf32>
    %cst_31 = arith.constant 2.000000e+01 : f32
    %34 = vector.broadcast %cst_31 : f32 to vector<16x128xf32>
    %35 = arith.minimumf %31, %34 : vector<16x128xf32>
    %36 = math.exp %35 : vector<16x128xf32>
    %37 = math.log1p %36 : vector<16x128xf32>
    %38 = arith.select %33, %31, %37 : vector<16x128xi1>, vector<16x128xf32>
    %39 = vector.shape_cast %38 : vector<16x128xf32> to vector<2x8x128xf32>
    %c0_32 = arith.constant 0 : index
    %c0_33 = arith.constant 0 : index
    %c0_34 = arith.constant 0 : index
    %40 = vector.load %arg5[%c0_32, %c0_33, %c0_34] : memref<2x8x128xf32, #tpu.memory_space<vmem>>, vector<2x8x128xf32>
    tpu.vector_store %arg5[%c0_32, %c0_33, %c0_34], %39 {strides = array<i32>} : memref<2x8x128xf32, #tpu.memory_space<vmem>>, vector<2x8x128xf32>,
    return
  }
  func.func @transform_0(%arg0: i32, %arg1: i32) -> (i32, i32, i32, i32) {
    %c0_i32 = arith.constant 0 : i32
    %c0_i32_0 = arith.constant 0 : i32
    %c0_i32_1 = arith.constant 0 : i32
    return %arg0, %c0_i32, %arg1, %c0_i32_0 : i32, i32, i32, i32
  }
  func.func @transform_1(%arg0: i32, %arg1: i32) -> (i32, i32, i32) {
    %c0_i32 = arith.constant 0 : i32
    %c0_i32_0 = arith.constant 0 : i32
    %c0_i32_1 = arith.constant 0 : i32
    %c0_i32_2 = arith.constant 0 : i32
    return %c0_i32, %c0_i32_0, %c0_i32_1 : i32, i32, i32
  }
  func.func @transform_2(%arg0: i32, %arg1: i32) -> (i32, i32) {
    %c0_i32 = arith.constant 0 : i32
    %c0_i32_0 = arith.constant 0 : i32
    %c0_i32_1 = arith.constant 0 : i32
    return %c0_i32, %c0_i32_0 : i32, i32
  }
  func.func @transform_3(%arg0: i32, %arg1: i32) -> (i32, i32, i32) {
    %c0_i32 = arith.constant 0 : i32
    %c0_i32_0 = arith.constant 0 : i32
    return %arg0, %arg1, %c0_i32 : i32, i32, i32
  }
}

</mosaic_0001>

<llo_original>
// kernel: tpu_custom_call.1
$region0: #{tpu_custom_call.1}
  #allocation0 [shape = 'u32[]', space=smem, size = 0x4, offset = 0x4, fixed_abs, tag = 'smem constant byte address 0x4 - core index']
  #allocation1 [shape = 'u32[144,128]{1,0:T(1,128)}', space=vmem, size = 0x12000, scoped, tag = 'internal scratch']
  %s0 = inlined_call_operand.hbm [shape: f32[2,4,8,256], index: 0, kind: input, shape index: {}]
  %s1 = inlined_call_operand.hbm [shape: f32[4,256,128], index: 1, kind: input, shape index: {}]
  %s2 = inlined_call_operand.vmem [shape: f32[1,128], index: 2, kind: input, shape index: {}]
  %s3 = inlined_call_operand.hbm [shape: f32[2,8,128], index: 3, kind: output, shape index: {}]
  %s4 = sld [smem:[#allocation0]]
  $region30: #{tpu_custom_call.1} parent=0
    _
  %s6 = ssub.s32 1, %s4
  %s7 = scalar_select 0, %s6, %s4
  $region1: #{tpu_custom_call.1} parent=0
    #allocation2 [shape = 'u8[65536]{0}', space=vmem, size = 0x10000, scoped, tag = 'input window, operand 0, single buffered']
    #allocation3 [shape = 's32[1]{0}', space=sflag, size = 0x4, scoped, tag = 'scoped memory for tpu_custom_call.1']
    #allocation4 [shape = 's32[1]{0}', space=sflag, size = 0x4, scoped, tag = 'scoped memory for tpu_custom_call.1']
    #allocation5 [shape = 'u8[524288]{0}', space=vmem, size = 0x80000, scoped, tag = 'input window, operand 1, single buffered']
    #allocation6 [shape = 's32[1]{0}', space=sflag, size = 0x4, scoped, tag = 'scoped memory for tpu_custom_call.1']
    #allocation7 [shape = 'u8[8192]{0}', space=vmem, size = 0x2000, scoped, tag = 'output window, operand 0, single buffered']
    %8 = vsyncpa [#allocation3], 0
    %9 = vsyncpa [#allocation6], 0
    %10 = vsyncpa [#allocation4], 0
    // Predicated region
    $region2: #{tpu_custom_call.1} parent=1 // pred_check
      _
    $region3: #{tpu_custom_call.1} parent=1 // pred_check_branch
      %12 = sbr.rel (0) target = $region5
    $region4: #{tpu_custom_call.1} parent=1 // pred_region
      %s14 = ssub.s32 2048, 2048
      %15 = vsyncadd [#allocation3], %s14
      %s16 = sshll.u32 [#allocation2], 4
      %s17 = int_to_ptr.vmem [resolvable:$true] %s16
      %22 = dma.hbm_to_vmem [thread:$0]  %s0, 2048, %s17, [#allocation3], 256, 256, 16
    $region5: #{tpu_custom_call.1} parent=1 // pred_fallthru
      _
    // Predicated region
    $region6: #{tpu_custom_call.1} parent=1 // pred_check
      _
    $region7: #{tpu_custom_call.1} parent=1 // pred_check_branch
      %24 = sbr.rel (0) target = $region9
    $region8: #{tpu_custom_call.1} parent=1 // pred_region
      %s26 = ssub.s32 16384, 16384
      %27 = vsyncadd [#allocation6], %s26
      %s28 = sshll.u32 [#allocation5], 4
      %s29 = int_to_ptr.vmem [resolvable:$true] %s28
      %34 = dma.hbm_to_vmem [thread:$0]  %s1, 16384, %s29, [#allocation6], 128, 128, 8
    $region9: #{tpu_custom_call.1} parent=1 // pred_fallthru
      _
    // Predicated region
    $region10: #{tpu_custom_call.1} parent=1 // pred_check
      _
    $region11: #{tpu_custom_call.1} parent=1 // pred_check_branch
      %36 = sbr.rel (0) target = $region13
    $region12: #{tpu_custom_call.1} parent=1 // pred_region
      _
    $region13: #{tpu_custom_call.1} parent=1 // pred_fallthru
      _
    // Predicated region
    $region14: #{tpu_custom_call.1} parent=1 // pred_check
      _
    $region15: #{tpu_custom_call.1} parent=1 // pred_check_branch
      %38 = sbr.rel (0) target = $region17
    $region16: #{tpu_custom_call.1} parent=1 // pred_region
      %39 = dma.done [#allocation3], 2048
    $region17: #{tpu_custom_call.1} parent=1 // pred_fallthru
      _
    // Predicated region
    $region18: #{tpu_custom_call.1} parent=1 // pred_check
      _
    $region19: #{tpu_custom_call.1} parent=1 // pred_check_branch
      %41 = sbr.rel (0) target = $region21
    $region20: #{tpu_custom_call.1} parent=1 // pred_region
      %42 = dma.done [#allocation6], 16384
    $region21: #{tpu_custom_call.1} parent=1 // pred_fallthru
      _
    %v43 = vld [vmem:[#allocation2] sm:$0xff]
    %v44 = vld [vmem:[#allocation2 + $0x8] sm:$0xff]
    %v45 = vld [vmem:[#allocation2 + $0x40] sm:$0xff]
    %v46 = vld [vmem:[#allocation2 + $0x48] sm:$0xff]
    %v47 = vld [vmem:[#allocation5] sm:$0xff]
    %v48 = vld [vmem:[#allocation5 + $0x8] sm:$0xff]
    %v49 = vld [vmem:[#allocation5 + $0x10] sm:$0xff]
    %v50 = vld [vmem:[#allocation5 + $0x18] sm:$0xff]
    %v51 = vld [vmem:[#allocation5 + $0x20] sm:$0xff]
    %v52 = vld [vmem:[#allocation5 + $0x28] sm:$0xff]
    %v53 = vld [vmem:[#allocation5 + $0x30] sm:$0xff]
    %v54 = vld [vmem:[#allocation5 + $0x38] sm:$0xff]
    %v55 = vld [vmem:[#allocation5 + $0x40] sm:$0xff]
    %v56 = vld [vmem:[#allocation5 + $0x48] sm:$0xff]
    %v57 = vld [vmem:[#allocation5 + $0x50] sm:$0xff]
    %v58 = vld [vmem:[#allocation5 + $0x58] sm:$0xff]
    %v59 = vld [vmem:[#allocation5 + $0x60] sm:$0xff]
    %v60 = vld [vmem:[#allocation5 + $0x68] sm:$0xff]
    %v61 = vld [vmem:[#allocation5 + $0x70] sm:$0xff]
    %v62 = vld [vmem:[#allocation5 + $0x78] sm:$0xff]
    %v63 = vld [vmem:[#allocation5 + $0x80] sm:$0xff]
    %v64 = vld [vmem:[#allocation5 + $0x88] sm:$0xff]
    %v65 = vld [vmem:[#allocation5 + $0x90] sm:$0xff]
    %v66 = vld [vmem:[#allocation5 + $0x98] sm:$0xff]
    %v67 = vld [vmem:[#allocation5 + $0xa0] sm:$0xff]
    %v68 = vld [vmem:[#allocation5 + $0xa8] sm:$0xff]
    %v69 = vld [vmem:[#allocation5 + $0xb0] sm:$0xff]
    %v70 = vld [vmem:[#allocation5 + $0xb8] sm:$0xff]
    %v71 = vld [vmem:[#allocation5 + $0xc0] sm:$0xff]
    %v72 = vld [vmem:[#allocation5 + $0xc8] sm:$0xff]
    %v73 = vld [vmem:[#allocation5 + $0xd0] sm:$0xff]
    %v74 = vld [vmem:[#allocation5 + $0xd8] sm:$0xff]
    %v75 = vld [vmem:[#allocation5 + $0xe0] sm:$0xff]
    %v76 = vld [vmem:[#allocation5 + $0xe8] sm:$0xff]
    %v77 = vld [vmem:[#allocation5 + $0xf0] sm:$0xff]
    %v78 = vld [vmem:[#allocation5 + $0xf8] sm:$0xff]
    %s79 = scalar_lea.vmem [#allocation2], 16
    %v80 = vld [vmem:[%s79] sm:$0xff]
    %v81 = vld [vmem:[%s79 + $0x8] sm:$0xff]
    %v82 = vld [vmem:[%s79 + $0x40] sm:$0xff]
    %v83 = vld [vmem:[%s79 + $0x48] sm:$0xff]
    %s84 = scalar_lea.vmem [#allocation5], 256
    %v85 = vld [vmem:[%s84] sm:$0xff]
    %v86 = vld [vmem:[%s84 + $0x8] sm:$0xff]
    %v87 = vld [vmem:[%s84 + $0x10] sm:$0xff]
    %v88 = vld [vmem:[%s84 + $0x18] sm:$0xff]
    %v89 = vld [vmem:[%s84 + $0x20] sm:$0xff]
    %v90 = vld [vmem:[%s84 + $0x28] sm:$0xff]
    %v91 = vld [vmem:[%s84 + $0x30] sm:$0xff]
    %v92 = vld [vmem:[%s84 + $0x38] sm:$0xff]
    %v93 = vld [vmem:[%s84 + $0x40] sm:$0xff]
    %v94 = vld [vmem:[%s84 + $0x48] sm:$0xff]
    %v95 = vld [vmem:[%s84 + $0x50] sm:$0xff]
    %v96 = vld [vmem:[%s84 + $0x58] sm:$0xff]
    %v97 = vld [vmem:[%s84 + $0x60] sm:$0xff]
    %v98 = vld [vmem:[%s84 + $0x68] sm:$0xff]
    %v99 = vld [vmem:[%s84 + $0x70] sm:$0xff]
    %v100 = vld [vmem:[%s84 + $0x78] sm:$0xff]
    %v101 = vld [vmem:[%s84 + $0x80] sm:$0xff]
    %v102 = vld [vmem:[%s84 + $0x88] sm:$0xff]
    %v103 = vld [vmem:[%s84 + $0x90] sm:$0xff]
    %v104 = vld [vmem:[%s84 + $0x98] sm:$0xff]
    %v105 = vld [vmem:[%s84 + $0xa0] sm:$0xff]
    %v106 = vld [vmem:[%s84 + $0xa8] sm:$0xff]
    %v107 = vld [vmem:[%s84 + $0xb0] sm:$0xff]
    %v108 = vld [vmem:[%s84 + $0xb8] sm:$0xff]
    %v109 = vld [vmem:[%s84 + $0xc0] sm:$0xff]
    %v110 = vld [vmem:[%s84 + $0xc8] sm:$0xff]
    %v111 = vld [vmem:[%s84 + $0xd0] sm:$0xff]
    %v112 = vld [vmem:[%s84 + $0xd8] sm:$0xff]
    %v113 = vld [vmem:[%s84 + $0xe0] sm:$0xff]
    %v114 = vld [vmem:[%s84 + $0xe8] sm:$0xff]
    %v115 = vld [vmem:[%s84 + $0xf0] sm:$0xff]
    %v116 = vld [vmem:[%s84 + $0xf8] sm:$0xff]
    %117 = vmatprep.subr.mxu0 0.0
    %118 = vmatpush1.msra.mxu0 %v85
    %119 = vmatprep.subr.mxu0 0.0
    %120 = vmatpush1.msra.mxu0 %v86
    %121 = vmatprep.subr.mxu0 0.0
    %122 = vmatpush1.msra.mxu0 %v87
    %123 = vmatprep.subr.mxu0 0.0
    %124 = vmatpush1.msra.mxu0 %v88
    %125 = vmatprep.subr.mxu0 0.0
    %126 = vmatpush1.msra.mxu0 %v89
    %127 = vmatprep.subr.mxu0 0.0
    %128 = vmatpush1.msra.mxu0 %v90
    %129 = vmatprep.subr.mxu0 0.0
    %130 = vmatpush1.msra.mxu0 %v91
    %131 = vmatprep.subr.mxu0 0.0
    %132 = vmatpush1.msra.mxu0 %v92
    %133 = vmatprep.subr.mxu0 0.0
    %134 = vmatpush1.msra.mxu0 %v93
    %135 = vmatprep.subr.mxu0 0.0
    %136 = vmatpush1.msra.mxu0 %v94
    %137 = vmatprep.subr.mxu0 0.0
    %138 = vmatpush1.msra.mxu0 %v95
    %139 = vmatprep.subr.mxu0 0.0
    %140 = vmatpush1.msra.mxu0 %v96
    %141 = vmatprep.subr.mxu0 0.0
    %142 = vmatpush1.msra.mxu0 %v97
    %143 = vmatprep.subr.mxu0 0.0
    %144 = vmatpush1.msra.mxu0 %v98
    %145 = vmatprep.subr.mxu0 0.0
    %146 = vmatpush1.msra.mxu0 %v99
    %147 = vmatprep.subr.mxu0 0.0
    %148 = vmatpush1.msra.mxu0 %v100
    %149 = vmatprep.subr.mxu0 0.0
    %150 = vmatpush1.msra.mxu0 %v101
    %151 = vmatprep.subr.mxu0 0.0
    %152 = vmatpush1.msra.mxu0 %v102
    %153 = vmatprep.subr.mxu0 0.0
    %154 = vmatpush1.msra.mxu0 %v103
    %155 = vmatprep.subr.mxu0 0.0
    %156 = vmatpush1.msra.mxu0 %v104
    %157 = vmatprep.subr.mxu0 0.0
    %158 = vmatpush1.msra.mxu0 %v105
    %159 = vmatprep.subr.mxu0 0.0
    %160 = vmatpush1.msra.mxu0 %v106
    %161 = vmatprep.subr.mxu0 0.0
    %162 = vmatpush1.msra.mxu0 %v107
    %163 = vmatprep.subr.mxu0 0.0
    %164 = vmatpush1.msra.mxu0 %v108
    %165 = vmatprep.subr.mxu0 0.0
    %166 = vmatpush1.msra.mxu0 %v109
    %167 = vmatprep.subr.mxu0 0.0
    %168 = vmatpush1.msra.mxu0 %v110
    %169 = vmatprep.subr.mxu0 0.0
    %170 = vmatpush1.msra.mxu0 %v111
    %171 = vmatprep.subr.mxu0 0.0
    %172 = vmatpush1.msra.mxu0 %v112
    %173 = vmatprep.subr.mxu0 0.0
    %174 = vmatpush1.msra.mxu0 %v113
    %175 = vmatprep.subr.mxu0 0.0
    %176 = vmatpush1.msra.mxu0 %v114
    %177 = vmatprep.subr.mxu0 0.0
    %178 = vmatpush1.msra.mxu0 %v115
    %179 = vmatprep.subr.mxu0 0.0
    %180 = vmatpush1.msra.mxu0 %v116
    %181 = vmatprep.mubr.f32.mxu0 %v81
    %182 = vmatmul.mubr.f32.gmra.mrb[0].mxu0 %v80
    %v183 = vpop.f32.mrb[0].mxu0
    %v184 = vadd.f32 0.0, %v183
    %v185 = vpop.f32.mrb[0].mxu0
    %186 = vmatprep.mubr.f32.mxu0 %v83
    %187 = vmatmul.mubr.f32.gmra.mrb[0].mxu0 %v82
    %v188 = vpop.f32.mrb[0].mxu0
    %v189 = vadd.f32 0.0, %v188
    %v190 = vpop.f32.mrb[0].mxu0
    %191 = vdwg.mxu0
    %192 = vmatprep.subr.mxu0 0.0
    %193 = vmatpush1.msra.mxu0 %v47
    %194 = vmatprep.subr.mxu0 0.0
    %195 = vmatpush1.msra.mxu0 %v48
    %196 = vmatprep.subr.mxu0 0.0
    %197 = vmatpush1.msra.mxu0 %v49
    %198 = vmatprep.subr.mxu0 0.0
    %199 = vmatpush1.msra.mxu0 %v50
    %200 = vmatprep.subr.mxu0 0.0
    %201 = vmatpush1.msra.mxu0 %v51
    %202 = vmatprep.subr.mxu0 0.0
    %203 = vmatpush1.msra.mxu0 %v52
    %204 = vmatprep.subr.mxu0 0.0
    %205 = vmatpush1.msra.mxu0 %v53
    %206 = vmatprep.subr.mxu0 0.0
    %207 = vmatpush1.msra.mxu0 %v54
    %208 = vmatprep.subr.mxu0 0.0
    %209 = vmatpush1.msra.mxu0 %v55
    %210 = vmatprep.subr.mxu0 0.0
    %211 = vmatpush1.msra.mxu0 %v56
    %212 = vmatprep.subr.mxu0 0.0
    %213 = vmatpush1.msra.mxu0 %v57
    %214 = vmatprep.subr.mxu0 0.0
    %215 = vmatpush1.msra.mxu0 %v58
    %216 = vmatprep.subr.mxu0 0.0
    %217 = vmatpush1.msra.mxu0 %v59
    %218 = vmatprep.subr.mxu0 0.0
    %219 = vmatpush1.msra.mxu0 %v60
    %220 = vmatprep.subr.mxu0 0.0
    %221 = vmatpush1.msra.mxu0 %v61
    %222 = vmatprep.subr.mxu0 0.0
    %223 = vmatpush1.msra.mxu0 %v62
    %224 = vmatprep.subr.mxu0 0.0
    %225 = vmatpush1.msra.mxu0 %v63
    %226 = vmatprep.subr.mxu0 0.0
    %227 = vmatpush1.msra.mxu0 %v64
    %228 = vmatprep.subr.mxu0 0.0
    %229 = vmatpush1.msra.mxu0 %v65
    %230 = vmatprep.subr.mxu0 0.0
    %231 = vmatpush1.msra.mxu0 %v66
    %232 = vmatprep.subr.mxu0 0.0
    %233 = vmatpush1.msra.mxu0 %v67
    %234 = vmatprep.subr.mxu0 0.0
    %235 = vmatpush1.msra.mxu0 %v68
    %236 = vmatprep.subr.mxu0 0.0
    %237 = vmatpush1.msra.mxu0 %v69
    %238 = vmatprep.subr.mxu0 0.0
    %239 = vmatpush1.msra.mxu0 %v70
    %240 = vmatprep.subr.mxu0 0.0
    %241 = vmatpush1.msra.mxu0 %v71
    %242 = vmatprep.subr.mxu0 0.0
    %243 = vmatpush1.msra.mxu0 %v72
    %244 = vmatprep.subr.mxu0 0.0
    %245 = vmatpush1.msra.mxu0 %v73
    %246 = vmatprep.subr.mxu0 0.0
    %247 = vmatpush1.msra.mxu0 %v74
    %248 = vmatprep.subr.mxu0 0.0
    %249 = vmatpush1.msra.mxu0 %v75
    %250 = vmatprep.subr.mxu0 0.0
    %251 = vmatpush1.msra.mxu0 %v76
    %252 = vmatprep.subr.mxu0 0.0
    %253 = vmatpush1.msra.mxu0 %v77
    %254 = vmatprep.subr.mxu0 0.0
    %255 = vmatpush1.msra.mxu0 %v78
    %256 = vmatprep.mubr.f32.mxu0 %v44
    %257 = vmatmul.mubr.f32.gmra.mrb[0].mxu0 %v43
    %v258 = vpop.f32.mrb[0].mxu0
    %v259 = vadd.f32 %v184, %v258
    %v260 = vpop.f32.mrb[0].mxu0
    %261 = vmatprep.mubr.f32.mxu0 %v46
    %262 = vmatmul.mubr.f32.gmra.mrb[0].mxu0 %v45
    %v263 = vpop.f32.mrb[0].mxu0
    %v264 = vadd.f32 %v189, %v263
    %v265 = vpop.f32.mrb[0].mxu0
    %266 = vdwg.mxu0
    %s267 = scalar_lea.vmem [#allocation2], 32
    %v268 = vld [vmem:[%s267] sm:$0xff]
    %v269 = vld [vmem:[%s267 + $0x8] sm:$0xff]
    %v270 = vld [vmem:[%s267 + $0x40] sm:$0xff]
    %v271 = vld [vmem:[%s267 + $0x48] sm:$0xff]
    %s272 = scalar_lea.vmem [#allocation5], 512
    %v273 = vld [vmem:[%s272] sm:$0xff]
    %v274 = vld [vmem:[%s272 + $0x8] sm:$0xff]
    %v275 = vld [vmem:[%s272 + $0x10] sm:$0xff]
    %v276 = vld [vmem:[%s272 + $0x18] sm:$0xff]
    %v277 = vld [vmem:[%s272 + $0x20] sm:$0xff]
    %v278 = vld [vmem:[%s272 + $0x28] sm:$0xff]
    %v279 = vld [vmem:[%s272 + $0x30] sm:$0xff]
    %v280 = vld [vmem:[%s272 + $0x38] sm:$0xff]
    %v281 = vld [vmem:[%s272 + $0x40] sm:$0xff]
    %v282 = vld [vmem:[%s272 + $0x48] sm:$0xff]
    %v283 = vld [vmem:[%s272 + $0x50] sm:$0xff]
    %v284 = vld [vmem:[%s272 + $0x58] sm:$0xff]
    %v285 = vld [vmem:[%s272 + $0x60] sm:$0xff]
    %v286 = vld [vmem:[%s272 + $0x68] sm:$0xff]
    %v287 = vld [vmem:[%s272 + $0x70] sm:$0xff]
    %v288 = vld [vmem:[%s272 + $0x78] sm:$0xff]
    %v289 = vld [vmem:[%s272 + $0x80] sm:$0xff]
    %v290 = vld [vmem:[%s272 + $0x88] sm:$0xff]
    %v291 = vld [vmem:[%s272 + $0x90] sm:$0xff]
    %v292 = vld [vmem:[%s272 + $0x98] sm:$0xff]
    %v293 = vld [vmem:[%s272 + $0xa0] sm:$0xff]
    %v294 = vld [vmem:[%s272 + $0xa8] sm:$0xff]
    %v295 = vld [vmem:[%s272 + $0xb0] sm:$0xff]
    %v296 = vld [vmem:[%s272 + $0xb8] sm:$0xff]
    %v297 = vld [vmem:[%s272 + $0xc0] sm:$0xff]
    %v298 = vld [vmem:[%s272 + $0xc8] sm:$0xff]
    %v299 = vld [vmem:[%s272 + $0xd0] sm:$0xff]
    %v300 = vld [vmem:[%s272 + $0xd8] sm:$0xff]
    %v301 = vld [vmem:[%s272 + $0xe0] sm:$0xff]
    %v302 = vld [vmem:[%s272 + $0xe8] sm:$0xff]
    %v303 = vld [vmem:[%s272 + $0xf0] sm:$0xff]
    %v304 = vld [vmem:[%s272 + $0xf8] sm:$0xff]
    %305 = vmatprep.subr.mxu0 0.0
    %306 = vmatpush1.msra.mxu0 %v273
    %307 = vmatprep.subr.mxu0 0.0
    %308 = vmatpush1.msra.mxu0 %v274
    %309 = vmatprep.subr.mxu0 0.0
    %310 = vmatpush1.msra.mxu0 %v275
    %311 = vmatprep.subr.mxu0 0.0
    %312 = vmatpush1.msra.mxu0 %v276
    %313 = vmatprep.subr.mxu0 0.0
    %314 = vmatpush1.msra.mxu0 %v277
    %315 = vmatprep.subr.mxu0 0.0
    %316 = vmatpush1.msra.mxu0 %v278
    %317 = vmatprep.subr.mxu0 0.0
    %318 = vmatpush1.msra.mxu0 %v279
    %319 = vmatprep.subr.mxu0 0.0
    %320 = vmatpush1.msra.mxu0 %v280
    %321 = vmatprep.subr.mxu0 0.0
    %322 = vmatpush1.msra.mxu0 %v281
    %323 = vmatprep.subr.mxu0 0.0
    %324 = vmatpush1.msra.mxu0 %v282
    %325 = vmatprep.subr.mxu0 0.0
    %326 = vmatpush1.msra.mxu0 %v283
    %327 = vmatprep.subr.mxu0 0.0
    %328 = vmatpush1.msra.mxu0 %v284
    %329 = vmatprep.subr.mxu0 0.0
    %330 = vmatpush1.msra.mxu0 %v285
    %331 = vmatprep.subr.mxu0 0.0
    %332 = vmatpush1.msra.mxu0 %v286
    %333 = vmatprep.subr.mxu0 0.0
    %334 = vmatpush1.msra.mxu0 %v287
    %335 = vmatprep.subr.mxu0 0.0
    %336 = vmatpush1.msra.mxu0 %v288
    %337 = vmatprep.subr.mxu0 0.0
    %338 = vmatpush1.msra.mxu0 %v289
    %339 = vmatprep.subr.mxu0 0.0
    %340 = vmatpush1.msra.mxu0 %v290
    %341 = vmatprep.subr.mxu0 0.0
    %342 = vmatpush1.msra.mxu0 %v291
    %343 = vmatprep.subr.mxu0 0.0
    %344 = vmatpush1.msra.mxu0 %v292
    %345 = vmatprep.subr.mxu0 0.0
    %346 = vmatpush1.msra.mxu0 %v293
    %347 = vmatprep.subr.mxu0 0.0
    %348 = vmatpush1.msra.mxu0 %v294
    %349 = vmatprep.subr.mxu0 0.0
    %350 = vmatpush1.msra.mxu0 %v295
    %351 = vmatprep.subr.mxu0 0.0
    %352 = vmatpush1.msra.mxu0 %v296
    %353 = vmatprep.subr.mxu0 0.0
    %354 = vmatpush1.msra.mxu0 %v297
    %355 = vmatprep.subr.mxu0 0.0
    %356 = vmatpush1.msra.mxu0 %v298
    %357 = vmatprep.subr.mxu0 0.0
    %358 = vmatpush1.msra.mxu0 %v299
    %359 = vmatprep.subr.mxu0 0.0
    %360 = vmatpush1.msra.mxu0 %v300
    %361 = vmatprep.subr.mxu0 0.0
    %362 = vmatpush1.msra.mxu0 %v301
    %363 = vmatprep.subr.mxu0 0.0
    %364 = vmatpush1.msra.mxu0 %v302
    %365 = vmatprep.subr.mxu0 0.0
    %366 = vmatpush1.msra.mxu0 %v303
    %367 = vmatprep.subr.mxu0 0.0
    %368 = vmatpush1.msra.mxu0 %v304
    %369 = vmatprep.mubr.f32.mxu0 %v269
    %370 = vmatmul.mubr.f32.gmra.mrb[0].mxu0 %v268
    %v371 = vpop.f32.mrb[0].mxu0
    %v372 = vadd.f32 0.0, %v371
    %v373 = vpop.f32.mrb[0].mxu0
    %374 = vmatprep.mubr.f32.mxu0 %v271
    %375 = vmatmul.mubr.f32.gmra.mrb[0].mxu0 %v270
    %v376 = vpop.f32.mrb[0].mxu0
    %v377 = vadd.f32 0.0, %v376
    %v378 = vpop.f32.mrb[0].mxu0
    %379 = vdwg.mxu0
    %v380 = vadd.f32 %v259, %v372
    %v381 = vadd.f32 %v264, %v377
    %s382 = scalar_lea.vmem [#allocation2], 48
    %v383 = vld [vmem:[%s382] sm:$0xff]
    %v384 = vld [vmem:[%s382 + $0x8] sm:$0xff]
    %v385 = vld [vmem:[%s382 + $0x40] sm:$0xff]
    %v386 = vld [vmem:[%s382 + $0x48] sm:$0xff]
    %s387 = scalar_lea.vmem [#allocation5], 768
    %v388 = vld [vmem:[%s387] sm:$0xff]
    %v389 = vld [vmem:[%s387 + $0x8] sm:$0xff]
    %v390 = vld [vmem:[%s387 + $0x10] sm:$0xff]
    %v391 = vld [vmem:[%s387 + $0x18] sm:$0xff]
    %v392 = vld [vmem:[%s387 + $0x20] sm:$0xff]
    %v393 = vld [vmem:[%s387 + $0x28] sm:$0xff]
    %v394 = vld [vmem:[%s387 + $0x30] sm:$0xff]
    %v395 = vld [vmem:[%s387 + $0x38] sm:$0xff]
    %v396 = vld [vmem:[%s387 + $0x40] sm:$0xff]
    %v397 = vld [vmem:[%s387 + $0x48] sm:$0xff]
    %v398 = vld [vmem:[%s387 + $0x50] sm:$0xff]
    %v399 = vld [vmem:[%s387 + $0x58] sm:$0xff]
    %v400 = vld [vmem:[%s387 + $0x60] sm:$0xff]
    %v401 = vld [vmem:[%s387 + $0x68] sm:$0xff]
    %v402 = vld [vmem:[%s387 + $0x70] sm:$0xff]
    %v403 = vld [vmem:[%s387 + $0x78] sm:$0xff]
    %v404 = vld [vmem:[%s387 + $0x80] sm:$0xff]
    %v405 = vld [vmem:[%s387 + $0x88] sm:$0xff]
    %v406 = vld [vmem:[%s387 + $0x90] sm:$0xff]
    %v407 = vld [vmem:[%s387 + $0x98] sm:$0xff]
    %v408 = vld [vmem:[%s387 + $0xa0] sm:$0xff]
    %v409 = vld [vmem:[%s387 + $0xa8] sm:$0xff]
    %v410 = vld [vmem:[%s387 + $0xb0] sm:$0xff]
    %v411 = vld [vmem:[%s387 + $0xb8] sm:$0xff]
    %v412 = vld [vmem:[%s387 + $0xc0] sm:$0xff]
    %v413 = vld [vmem:[%s387 + $0xc8] sm:$0xff]
    %v414 = vld [vmem:[%s387 + $0xd0] sm:$0xff]
    %v415 = vld [vmem:[%s387 + $0xd8] sm:$0xff]
    %v416 = vld [vmem:[%s387 + $0xe0] sm:$0xff]
    %v417 = vld [vmem:[%s387 + $0xe8] sm:$0xff]
    %v418 = vld [vmem:[%s387 + $0xf0] sm:$0xff]
    %v419 = vld [vmem:[%s387 + $0xf8] sm:$0xff]
    %420 = vmatprep.subr.mxu0 0.0
    %421 = vmatpush1.msra.mxu0 %v388
    %422 = vmatprep.subr.mxu0 0.0
    %423 = vmatpush1.msra.mxu0 %v389
    %424 = vmatprep.subr.mxu0 0.0
    %425 = vmatpush1.msra.mxu0 %v390
    %426 = vmatprep.subr.mxu0 0.0
    %427 = vmatpush1.msra.mxu0 %v391
    %428 = vmatprep.subr.mxu0 0.0
    %429 = vmatpush1.msra.mxu0 %v392
    %430 = vmatprep.subr.mxu0 0.0
    %431 = vmatpush1.msra.mxu0 %v393
    %432 = vmatprep.subr.mxu0 0.0
    %433 = vmatpush1.msra.mxu0 %v394
    %434 = vmatprep.subr.mxu0 0.0
    %435 = vmatpush1.msra.mxu0 %v395
    %436 = vmatprep.subr.mxu0 0.0
    %437 = vmatpush1.msra.mxu0 %v396
    %438 = vmatprep.subr.mxu0 0.0
    %439 = vmatpush1.msra.mxu0 %v397
    %440 = vmatprep.subr.mxu0 0.0
    %441 = vmatpush1.msra.mxu0 %v398
    %442 = vmatprep.subr.mxu0 0.0
    %443 = vmatpush1.msra.mxu0 %v399
    %444 = vmatprep.subr.mxu0 0.0
    %445 = vmatpush1.msra.mxu0 %v400
    %446 = vmatprep.subr.mxu0 0.0
    %447 = vmatpush1.msra.mxu0 %v401
    %448 = vmatprep.subr.mxu0 0.0
    %449 = vmatpush1.msra.mxu0 %v402
    %450 = vmatprep.subr.mxu0 0.0
    %451 = vmatpush1.msra.mxu0 %v403
    %452 = vmatprep.subr.mxu0 0.0
    %453 = vmatpush1.msra.mxu0 %v404
    %454 = vmatprep.subr.mxu0 0.0
    %455 = vmatpush1.msra.mxu0 %v405
    %456 = vmatprep.subr.mxu0 0.0
    %457 = vmatpush1.msra.mxu0 %v406
    %458 = vmatprep.subr.mxu0 0.0
    %459 = vmatpush1.msra.mxu0 %v407
    %460 = vmatprep.subr.mxu0 0.0
    %461 = vmatpush1.msra.mxu0 %v408
    %462 = vmatprep.subr.mxu0 0.0
    %463 = vmatpush1.msra.mxu0 %v409
    %464 = vmatprep.subr.mxu0 0.0
    %465 = vmatpush1.msra.mxu0 %v410
    %466 = vmatprep.subr.mxu0 0.0
    %467 = vmatpush1.msra.mxu0 %v411
    %468 = vmatprep.subr.mxu0 0.0
    %469 = vmatpush1.msra.mxu0 %v412
    %470 = vmatprep.subr.mxu0 0.0
    %471 = vmatpush1.msra.mxu0 %v413
    %472 = vmatprep.subr.mxu0 0.0
    %473 = vmatpush1.msra.mxu0 %v414
    %474 = vmatprep.subr.mxu0 0.0
    %475 = vmatpush1.msra.mxu0 %v415
    %476 = vmatprep.subr.mxu0 0.0
    %477 = vmatpush1.msra.mxu0 %v416
    %478 = vmatprep.subr.mxu0 0.0
    %479 = vmatpush1.msra.mxu0 %v417
    %480 = vmatprep.subr.mxu0 0.0
    %481 = vmatpush1.msra.mxu0 %v418
    %482 = vmatprep.subr.mxu0 0.0
    %483 = vmatpush1.msra.mxu0 %v419
    %484 = vmatprep.mubr.f32.mxu0 %v384
    %485 = vmatmul.mubr.f32.gmra.mrb[0].mxu0 %v383
    %v486 = vpop.f32.mrb[0].mxu0
    %v487 = vadd.f32 0.0, %v486
    %v488 = vpop.f32.mrb[0].mxu0
    %489 = vmatprep.mubr.f32.mxu0 %v386
    %490 = vmatmul.mubr.f32.gmra.mrb[0].mxu0 %v385
    %v491 = vpop.f32.mrb[0].mxu0
    %v492 = vadd.f32 0.0, %v491
    %v493 = vpop.f32.mrb[0].mxu0
    %494 = vdwg.mxu0
    %v495 = vadd.f32 %v380, %v487
    %v496 = vadd.f32 %v381, %v492
    %v497 = vld [vmem:[%s2] sm:$0x1]
    %v499 = vlaneseq
    %v500 = vshrl.u32 %v499, 7
    %v501 = vsub.s32 0, %v500
    %v502 = vrot.slane %v497, %v501
    %v504 = vadd.f32 %v495, %v502
    %v505 = vadd.f32 %v496, %v502
    %vm506 = vcmp.gt.f32.partialorder %v504, 20.0
    %vm507 = vcmp.gt.f32.partialorder %v505, 20.0
    %v508 = vmin.f32 %v504, 20.0
    %v509 = vmin.f32 %v505, 20.0
    %v510 = vmul.f32 %v508, 1.442695
    %v511 = vpow.pop %v510
    %v512 = vmul.f32 %v509, 1.442695
    %v513 = vpow.pop %v512
    %v514 = vadd.f32 %v511, 1.0
    %v515 = vlog2.pop %v514
    %v516 = vmul.f32 %v515, 0.6931472
    %v517 = vmul.f32 -0.5, %v511
    %v518 = vadd.f32 %v517, 1.0
    %v519 = vmul.f32 %v518, %v511
    %v520 = vand.u32 2147483647, %v511
    %vm521 = vcmp.lt.f32.partialorder %v520, 0.0004427343
    %v522 = vsel %vm521, %v519, %v516
    %v523 = vadd.f32 %v513, 1.0
    %v524 = vlog2.pop %v523
    %v525 = vmul.f32 %v524, 0.6931472
    %v526 = vmul.f32 -0.5, %v513
    %v527 = vadd.f32 %v526, 1.0
    %v528 = vmul.f32 %v527, %v513
    %v529 = vand.u32 2147483647, %v513
    %vm530 = vcmp.lt.f32.partialorder %v529, 0.0004427343
    %v531 = vsel %vm530, %v528, %v525
    %v532 = vsel %vm506, %v504, %v522
    %v533 = vsel %vm507, %v505, %v531
    %534 = vst [vmem:[#allocation7] sm:$0xff] %v532
    %535 = vst [vmem:[#allocation7 + $0x8] sm:$0xff] %v533
    // Predicated region
    $region22: #{tpu_custom_call.1} parent=1 // pred_check
      _
    $region23: #{tpu_custom_call.1} parent=1 // pred_check_branch
      %537 = sbr.rel (0) target = $region25
    $region24: #{tpu_custom_call.1} parent=1 // pred_region
      %s539 = ssub.s32 256, 256
      %540 = vsyncadd [#allocation4], %s539
      %s541 = sshll.u32 [#allocation7], 4
      %s542 = int_to_ptr.vmem [resolvable:$true] %s541
      %547 = dma.vmem_to_hbm [thread:$0]  %s542, 256, %s3, [#allocation4], 128, 128, 8
    $region25: #{tpu_custom_call.1} parent=1 // pred_fallthru
      _
    // Predicated region
    $region26: #{tpu_custom_call.1} parent=1 // pred_check
      _
    $region27: #{tpu_custom_call.1} parent=1 // pred_check_branch
      %549 = sbr.rel (0) target = $region29
    $region28: #{tpu_custom_call.1} parent=1 // pred_region
      %550 = dma.done [#allocation4], 256
    $region29: #{tpu_custom_call.1} parent=1 // pred_fallthru
      _
    %551 = vsyncpa [#allocation3], 1
    %552 = vsyncpa [#allocation6], 1
    %553 = vsyncpa [#allocation4], 1

</llo_original>
